<compile_context>
chip_gen: v5e
topology: v5e:2x2
jax: 0.10.0
libtpu: 0.0.40
codegen_flags: <defaults>
</compile_context>

<pallas_src>
import functools

import numpy as np
import jax
import jax.numpy as jnp
from jax.experimental import pallas as pl
from jax.experimental.pallas import tpu as pltpu

# ---- "config" values (synthetic, small) -------------------------------------
LSTM_INPUT_SIZE = 16
LSTM_HIDDEN_SIZE = 32
LSTM_NUM_LAYERS = 2
LSTM_NUM_CLASSES = 8
SEQ_LEN = 8


# ---- Pallas kernel -----------------------------------------------------------
def _lstm_fc_kernel(x_ref, w_in_ref, w_rec_ref, b_ref, w_fc_ref, b_fc_ref,
                    out_ref, *, hidden_size, num_layers, seq_len):
    """Wavefront multi-layer LSTM recurrence + FC head, fully VMEM/vreg resident.

    Packed-operand layouts (built host-side in pack_params):
      w_in  : (input_size, 4*L*H)  layer-0 W_ih^T scattered into the grouped
                                   gate layout (other layers' columns are 0),
                                   0.5 pre-scale folded in for i/f/o gates.
      w_rec : (L*H, 4*L*H)         block weights; row block m = h_m, column
                                   block (gate g, layer l) holds W_hh_l^T
                                   (m==l) and W_ih_l^T (m==l-1), pre-scaled.
      b     : (1, 4*L*H)           (b_ih + b_hh) per layer, grouped, pre-scaled.
      w_fc  : (L*H, C)             FC weight; only the top layer's rows nonzero.
      b_fc  : (1, C)
    Gate-group order along lanes: [i | f | g | o], each group L*H wide with
    layer l occupying lanes [l*H, (l+1)*H) within its group.
    """
    H = hidden_size
    L = num_layers
    LH = L * H
    n_wave = seq_len + L - 1

    # Post-activation affine turning tanh into sigmoid for the i/f/o groups
    # (the matching 0.5 pre-scale already lives in the packed weights/biases).
    glane = jax.lax.broadcasted_iota(jnp.int32, (1, 4 * LH), 1)
    is_g = jnp.logical_and(glane >= 2 * LH, glane < 3 * LH)
    post_scale = jnp.where(is_g, 1.0, 0.5).astype(jnp.float32)
    post_shift = jnp.where(is_g, 0.0, 0.5).astype(jnp.float32)
    lane = jax.lax.broadcasted_iota(jnp.int32, (1, LH), 1)  # boundary masks

    w_rec = w_rec_ref[...]          # (L*H, 4*L*H), loaded once
    b_all = b_ref[...]              # (1, 4*L*H)

    # Hoisted layer-0 input projection for the whole sequence (+ all biases):
    # one M=seq MXU matmul, off the serial chain.
    gx0 = jnp.dot(x_ref[...], w_in_ref[...],
                  preferred_element_type=jnp.float32) + b_all   # (seq, 4*L*H)

    hcat = jnp.zeros((1, LH), jnp.float32)   # [h_0 | h_1 | ... | h_{L-1}]
    ccat = jnp.zeros((1, LH), jnp.float32)   # [c_0 | c_1 | ... | c_{L-1}]
    outs = []

    for w in range(n_wave):                                     # fully unrolled
        # ONE block-diagonal MXU op for every layer's input+recurrent matmul.
        z = jnp.dot(hcat, w_rec, preferred_element_type=jnp.float32)  # (1,4LH)
        add = gx0[w:w + 1, :] if w < seq_len else b_all
        act = jnp.tanh(z + add) * post_scale + post_shift   # one EUP tanh, all
        i_g = act[:, 0:LH]                                   # gates, all layers
        f_g = act[:, LH:2 * LH]
        g_g = act[:, 2 * LH:3 * LH]
        o_g = act[:, 3 * LH:4 * LH]
        c_new = f_g * ccat + i_g * g_g
        h_new = o_g * jnp.tanh(c_new)                        # one narrow tanh

        # Layers active at this wavefront step (static, contiguous range).
        active = [l for l in range(L) if l <= w < seq_len + l]
        if len(active) == L:                     # steady state: no masking
            hcat, ccat = h_new, c_new
        else:                                    # ramp-up / ramp-down only
            mask = jnp.logical_and(lane >= active[0] * H,
                                   lane < (active[-1] + 1) * H)
            hcat = jnp.where(mask, h_new, hcat)
            ccat = jnp.where(mask, c_new, ccat)

        if w >= L - 1:                           # top layer emitted h(w-L+1)
            outs.append(hcat)

    # (seq, L*H): only the top layer's lanes carry weight in w_fc (rest are 0),
    # so no slicing is needed before the FC matmul.
    h_all = jnp.concatenate(outs, axis=0)
    out_ref[...] = (
        jnp.dot(h_all, w_fc_ref[...], preferred_element_type=jnp.float32)
        + b_fc_ref[...]
    )


# ---- one-time host-side parameter packing ------------------------------------
def pack_params(params, *, input_size, hidden_size, num_layers, num_classes):
    """Pack torch-convention LSTM/FC params into the fused kernel layout.

    Done once at parameter-preparation time (numpy, outside jit): folds the
    0.5 sigmoid-via-tanh pre-scale into weights/biases and builds the
    block-diagonal recurrent weight with gate-grouped columns.
    """
    H, L, C = hidden_size, num_layers, num_classes
    LH = L * H
    # per-gate pre-scale over torch row order [i, f, g, o]
    s = np.concatenate([np.full(H, 0.5), np.full(H, 0.5),
                        np.full(H, 1.0), np.full(H, 0.5)]).astype(np.float32)

    w_in = np.zeros((input_size, 4 * LH), np.float32)
    w_rec = np.zeros((LH, 4 * LH), np.float32)
    b_all = np.zeros((1, 4 * LH), np.float32)
    for l in range(L):
        wih, whh, bih, bhh = [np.asarray(a, np.float32)
                              for a in params[f"layer{l}"]]
        wih_s = wih * s[:, None]           # (4H, in_dim_l)
        whh_s = whh * s[:, None]           # (4H, H)
        b_s = (bih + bhh) * s              # (4H,)
        for g in range(4):                 # gate order [i, f, g, o]
            col = (g * L + l) * H
            rows = slice(g * H, (g + 1) * H)
            w_rec[l * H:(l + 1) * H, col:col + H] = whh_s[rows, :].T
            if l == 0:
                w_in[:, col:col + H] = wih_s[rows, :].T
            else:
                w_rec[(l - 1) * H:l * H, col:col + H] = wih_s[rows, :].T
            b_all[0, col:col + H] = b_s[rows]

    wfc, bfc = [np.asarray(a, np.float32) for a in params["fc"]]
    w_fc = np.zeros((LH, C), np.float32)
    w_fc[(L - 1) * H:, :] = wfc.T
    b_fc = bfc[None, :]

    return {
        "w_in": jnp.asarray(w_in), "w_rec": jnp.asarray(w_rec),
        "b_all": jnp.asarray(b_all), "w_fc": jnp.asarray(w_fc),
        "b_fc": jnp.asarray(b_fc),
    }


# ---- wrapper -----------------------------------------------------------------
def lstm_forward(x, packed, *, hidden_size, num_layers, num_classes):
    seq_len = x.shape[0]
    kernel = functools.partial(
        _lstm_fc_kernel,
        hidden_size=hidden_size,
        num_layers=num_layers,
        seq_len=seq_len,
    )
    flat_inputs = [x.astype(jnp.float32), packed["w_in"], packed["w_rec"],
                   packed["b_all"], packed["w_fc"], packed["b_fc"]]
    # Whole-array VMEM residency; no grid / tiling / pipelining machinery
    # (footprint is a few KiB — nothing to hide behind a pipeline).
    return pl.pallas_call(
        kernel,
        out_shape=jax.ShapeDtypeStruct((seq_len, num_classes), jnp.float32),
        in_specs=[pl.BlockSpec(memory_space=pltpu.MemorySpace.VMEM)]
        * len(flat_inputs),
        out_specs=pl.BlockSpec(memory_space=pltpu.MemorySpace.VMEM),
    )(*flat_inputs)


# ---- pure-JAX reference (for correctness check) -------------------------------
def ref_forward(x, params, *, hidden_size, num_layers):
    H = hidden_size
    h_in = x
    for l in range(num_layers):
        wih, whh, bih, bhh = params[f"layer{l}"]
        h = jnp.zeros((1, H), jnp.float32)
        c = jnp.zeros((1, H), jnp.float32)
        outs = []
        for t in range(h_in.shape[0]):
            x_t = h_in[t:t + 1]
            gates = x_t @ wih.T + h @ whh.T + bih + bhh
            i = jax.nn.sigmoid(gates[:, :H])
            f = jax.nn.sigmoid(gates[:, H:2 * H])
            g = jnp.tanh(gates[:, 2 * H:3 * H])
            o = jax.nn.sigmoid(gates[:, 3 * H:])
            c = f * c + i * g
            h = o * jnp.tanh(c)
            outs.append(h)
        h_in = jnp.concatenate(outs, axis=0)
    wfc, bfc = params["fc"]
    return h_in @ wfc.T + bfc


# ---- param init (deterministic, PyTorch-style U(-1/sqrt(H), 1/sqrt(H))) -------
def init_params(key, input_size, hidden_size, num_layers, num_classes):
    params = {}
    bound = 1.0 / jnp.sqrt(hidden_size)
    for l in range(num_layers):
        in_dim = input_size if l == 0 else hidden_size
        key, k1, k2, k3, k4 = jax.random.split(key, 5)
        params[f"layer{l}"] = (
            jax.random.uniform(k1, (4 * hidden_size, in_dim), jnp.float32,
                               -bound, bound),
            jax.random.uniform(k2, (4 * hidden_size, hidden_size), jnp.float32,
                               -bound, bound),
            jax.random.uniform(k3, (4 * hidden_size,), jnp.float32, -bound, bound),
            jax.random.uniform(k4, (4 * hidden_size,), jnp.float32, -bound, bound),
        )
    key, k1, k2 = jax.random.split(key, 3)
    fc_bound = 1.0 / jnp.sqrt(hidden_size)
    params["fc"] = (
        jax.random.uniform(k1, (num_classes, hidden_size), jnp.float32,
                           -fc_bound, fc_bound),
        jax.random.uniform(k2, (num_classes,), jnp.float32, -fc_bound, fc_bound),
    )
    return params


if __name__ == "__main__":
    key = jax.random.PRNGKey(0)
    key, kx = jax.random.split(key)

    params = init_params(key, LSTM_INPUT_SIZE, LSTM_HIDDEN_SIZE,
                         LSTM_NUM_LAYERS, LSTM_NUM_CLASSES)
    # module input (before the internal unsqueeze(0)): (seq, input_size)
    x = jax.random.normal(kx, (SEQ_LEN, LSTM_INPUT_SIZE), jnp.float32)

    packed = pack_params(params, input_size=LSTM_INPUT_SIZE,
                         hidden_size=LSTM_HIDDEN_SIZE,
                         num_layers=LSTM_NUM_LAYERS,
                         num_classes=LSTM_NUM_CLASSES)

    out = lstm_forward(
        x, packed,
        hidden_size=LSTM_HIDDEN_SIZE,
        num_layers=LSTM_NUM_LAYERS,
        num_classes=LSTM_NUM_CLASSES,
    )
    out = jax.block_until_ready(out)

    ref = ref_forward(x, params,
                      hidden_size=LSTM_HIDDEN_SIZE, num_layers=LSTM_NUM_LAYERS)
    assert out.shape == (SEQ_LEN, LSTM_NUM_CLASSES)
    # slightly relaxed tolerance: kernel uses sigmoid(x)=0.5*tanh(0.5x)+0.5 on
    # the EUP, which differs from the reference sigmoid by a few ulps.
    assert jnp.allclose(out, ref, atol=1e-4, rtol=1e-4), "mismatch vs reference"

    print("KERNEL_OK")
</pallas_src>

<mosaic_0001>
module attributes {stable_mosaic.version = 11 : i64} {
  func.func @_lstm_fc_kernel(%arg0: memref<8x16xf32, #tpu.memory_space<vmem>>, %arg1: memref<16x256xf32, #tpu.memory_space<vmem>>, %arg2: memref<64x256xf32, #tpu.memory_space<vmem>>, %arg3: memref<1x256xf32, #tpu.memory_space<vmem>>, %arg4: memref<64x8xf32, #tpu.memory_space<vmem>>, %arg5: memref<1x8xf32, #tpu.memory_space<vmem>>, %arg6: memref<8x8xf32, #tpu.memory_space<vmem>>) attributes {dimension_semantics = [], scalar_prefetch = 0 : i64, scratch_operands = 0 : i64, tpu.core_type = #tpu.core_type<tc>} {
    %0 = tpu.iota {dimensions = array<i32: 1>} : vector<1x256xi32>
    %c128_i32 = arith.constant 128 : i32
    %1 = vector.broadcast %c128_i32 : i32 to vector<1x256xi32>
    %2 = arith.cmpi sge, %0, %1 : vector<1x256xi32>
    %c192_i32 = arith.constant 192 : i32
    %3 = vector.broadcast %c192_i32 : i32 to vector<1x256xi32>
    %4 = arith.cmpi slt, %0, %3 : vector<1x256xi32>
    %5 = arith.andi %2, %4 : vector<1x256xi1>
    %cst = arith.constant 1.000000e+00 : f32
    %cst_0 = arith.constant 5.000000e-01 : f32
    %6 = vector.broadcast %cst : f32 to vector<1x256xf32>
    %7 = vector.broadcast %cst_0 : f32 to vector<1x256xf32>
    %8 = arith.select %5, %6, %7 : vector<1x256xi1>, vector<1x256xf32>
    %cst_1 = arith.constant 0.000000e+00 : f32
    %cst_2 = arith.constant 5.000000e-01 : f32
    %9 = vector.broadcast %cst_1 : f32 to vector<1x256xf32>
    %10 = vector.broadcast %cst_2 : f32 to vector<1x256xf32>
    %11 = arith.select %5, %9, %10 : vector<1x256xi1>, vector<1x256xf32>
    %12 = tpu.iota {dimensions = array<i32: 1>} : vector<1x64xi32>
    %c0 = arith.constant 0 : index
    %c0_3 = arith.constant 0 : index
    %13 = vector.load %arg2[%c0, %c0_3] : memref<64x256xf32, #tpu.memory_space<vmem>>, vector<64x256xf32>
    %c0_4 = arith.constant 0 : index
    %c0_5 = arith.constant 0 : index
    %14 = vector.load %arg3[%c0_4, %c0_5] : memref<1x256xf32, #tpu.memory_space<vmem>>, vector<1x256xf32>
    %c0_6 = arith.constant 0 : index
    %c0_7 = arith.constant 0 : index
    %15 = vector.load %arg0[%c0_6, %c0_7] : memref<8x16xf32, #tpu.memory_space<vmem>>, vector<8x16xf32>
    %c0_8 = arith.constant 0 : index
    %c0_9 = arith.constant 0 : index
    %16 = vector.load %arg1[%c0_8, %c0_9] : memref<16x256xf32, #tpu.memory_space<vmem>>, vector<16x256xf32>
    %cst_10 = arith.constant dense<0.000000e+00> : vector<8x256xf32>
    %17 = tpu.matmul %15, %16, %cst_10 {dimension_numbers = #tpu.dot_dimension_numbers<[1], [0], [0], [1], [0, 0, 1, 1], [], []>} : vector<8x16xf32>, vector<16x256xf32>, vector<8x256xf32> -> vector<8x256xf32>
    %18 = vector.broadcast %14 : vector<1x256xf32> to vector<8x256xf32>
    %19 = arith.addf %17, %18 : vector<8x256xf32>
    %cst_11 = arith.constant 0.000000e+00 : f32
    %20 = vector.broadcast %cst_11 : f32 to vector<1x64xf32>
    %cst_12 = arith.constant 0.000000e+00 : f32
    %21 = vector.broadcast %cst_12 : f32 to vector<1x64xf32>
    %cst_13 = arith.constant dense<0.000000e+00> : vector<1x256xf32>
    %22 = tpu.matmul %20, %13, %cst_13 {dimension_numbers = #tpu.dot_dimension_numbers<[1], [0], [0], [1], [0, 0, 1, 1], [], []>} : vector<1x64xf32>, vector<64x256xf32>, vector<1x256xf32> -> vector<1x256xf32>
    %23 = vector.extract_strided_slice %19 {offsets = [0, 0], sizes = [1, 256], strides = [1, 1]} : vector<8x256xf32> to vector<1x256xf32>
    %24 = arith.addf %22, %23 : vector<1x256xf32>
    %25 = math.tanh %24 : vector<1x256xf32>
    %26 = arith.mulf %25, %8 : vector<1x256xf32>
    %27 = arith.addf %26, %11 : vector<1x256xf32>
    %28 = vector.extract_strided_slice %27 {offsets = [0, 0], sizes = [1, 64], strides = [1, 1]} : vector<1x256xf32> to vector<1x64xf32>
    %29 = vector.extract_strided_slice %27 {offsets = [0, 64], sizes = [1, 64], strides = [1, 1]} : vector<1x256xf32> to vector<1x64xf32>
    %30 = vector.extract_strided_slice %27 {offsets = [0, 128], sizes = [1, 64], strides = [1, 1]} : vector<1x256xf32> to vector<1x64xf32>
    %31 = vector.extract_strided_slice %27 {offsets = [0, 192], sizes = [1, 64], strides = [1, 1]} : vector<1x256xf32> to vector<1x64xf32>
    %32 = arith.mulf %29, %21 : vector<1x64xf32>
    %33 = arith.mulf %28, %30 : vector<1x64xf32>
    %34 = arith.addf %32, %33 : vector<1x64xf32>
    %35 = math.tanh %34 : vector<1x64xf32>
    %36 = arith.mulf %31, %35 : vector<1x64xf32>
    %c0_i32 = arith.constant 0 : i32
    %37 = vector.broadcast %c0_i32 : i32 to vector<1x64xi32>
    %38 = arith.cmpi sge, %12, %37 : vector<1x64xi32>
    %c32_i32 = arith.constant 32 : i32
    %39 = vector.broadcast %c32_i32 : i32 to vector<1x64xi32>
    %40 = arith.cmpi slt, %12, %39 : vector<1x64xi32>
    %41 = arith.andi %38, %40 : vector<1x64xi1>
    %42 = arith.select %41, %36, %20 : vector<1x64xi1>, vector<1x64xf32>
    %43 = arith.select %41, %34, %21 : vector<1x64xi1>, vector<1x64xf32>
    %cst_14 = arith.constant dense<0.000000e+00> : vector<1x256xf32>
    %44 = tpu.matmul %42, %13, %cst_14 {dimension_numbers = #tpu.dot_dimension_numbers<[1], [0], [0], [1], [0, 0, 1, 1], [], []>} : vector<1x64xf32>, vector<64x256xf32>, vector<1x256xf32> -> vector<1x256xf32>
    %45 = vector.extract_strided_slice %19 {offsets = [1, 0], sizes = [1, 256], strides = [1, 1]} : vector<8x256xf32> to vector<1x256xf32>
    %46 = arith.addf %44, %45 : vector<1x256xf32>
    %47 = math.tanh %46 : vector<1x256xf32>
    %48 = arith.mulf %47, %8 : vector<1x256xf32>
    %49 = arith.addf %48, %11 : vector<1x256xf32>
    %50 = vector.extract_strided_slice %49 {offsets = [0, 0], sizes = [1, 64], strides = [1, 1]} : vector<1x256xf32> to vector<1x64xf32>
    %51 = vector.extract_strided_slice %49 {offsets = [0, 64], sizes = [1, 64], strides = [1, 1]} : vector<1x256xf32> to vector<1x64xf32>
    %52 = vector.extract_strided_slice %49 {offsets = [0, 128], sizes = [1, 64], strides = [1, 1]} : vector<1x256xf32> to vector<1x64xf32>
    %53 = vector.extract_strided_slice %49 {offsets = [0, 192], sizes = [1, 64], strides = [1, 1]} : vector<1x256xf32> to vector<1x64xf32>
    %54 = arith.mulf %51, %43 : vector<1x64xf32>
    %55 = arith.mulf %50, %52 : vector<1x64xf32>
    %56 = arith.addf %54, %55 : vector<1x64xf32>
    %57 = math.tanh %56 : vector<1x64xf32>
    %58 = arith.mulf %53, %57 : vector<1x64xf32>
    %cst_15 = arith.constant dense<0.000000e+00> : vector<1x256xf32>
    %59 = tpu.matmul %58, %13, %cst_15 {dimension_numbers = #tpu.dot_dimension_numbers<[1], [0], [0], [1], [0, 0, 1, 1], [], []>} : vector<1x64xf32>, vector<64x256xf32>, vector<1x256xf32> -> vector<1x256xf32>
    %60 = vector.extract_strided_slice %19 {offsets = [2, 0], sizes = [1, 256], strides = [1, 1]} : vector<8x256xf32> to vector<1x256xf32>
    %61 = arith.addf %59, %60 : vector<1x256xf32>
    %62 = math.tanh %61 : vector<1x256xf32>
    %63 = arith.mulf %62, %8 : vector<1x256xf32>
    %64 = arith.addf %63, %11 : vector<1x256xf32>
    %65 = vector.extract_strided_slice %64 {offsets = [0, 0], sizes = [1, 64], strides = [1, 1]} : vector<1x256xf32> to vector<1x64xf32>
    %66 = vector.extract_strided_slice %64 {offsets = [0, 64], sizes = [1, 64], strides = [1, 1]} : vector<1x256xf32> to vector<1x64xf32>
    %67 = vector.extract_strided_slice %64 {offsets = [0, 128], sizes = [1, 64], strides = [1, 1]} : vector<1x256xf32> to vector<1x64xf32>
    %68 = vector.extract_strided_slice %64 {offsets = [0, 192], sizes = [1, 64], strides = [1, 1]} : vector<1x256xf32> to vector<1x64xf32>
    %69 = arith.mulf %66, %56 : vector<1x64xf32>
    %70 = arith.mulf %65, %67 : vector<1x64xf32>
    %71 = arith.addf %69, %70 : vector<1x64xf32>
    %72 = math.tanh %71 : vector<1x64xf32>
    %73 = arith.mulf %68, %72 : vector<1x64xf32>
    %cst_16 = arith.constant dense<0.000000e+00> : vector<1x256xf32>
    %74 = tpu.matmul %73, %13, %cst_16 {dimension_numbers = #tpu.dot_dimension_numbers<[1], [0], [0], [1], [0, 0, 1, 1], [], []>} : vector<1x64xf32>, vector<64x256xf32>, vector<1x256xf32> -> vector<1x256xf32>
    %75 = vector.extract_strided_slice %19 {offsets = [3, 0], sizes = [1, 256], strides = [1, 1]} : vector<8x256xf32> to vector<1x256xf32>
    %76 = arith.addf %74, %75 : vector<1x256xf32>
    %77 = math.tanh %76 : vector<1x256xf32>
    %78 = arith.mulf %77, %8 : vector<1x256xf32>
    %79 = arith.addf %78, %11 : vector<1x256xf32>
    %80 = vector.extract_strided_slice %79 {offsets = [0, 0], sizes = [1, 64], strides = [1, 1]} : vector<1x256xf32> to vector<1x64xf32>
    %81 = vector.extract_strided_slice %79 {offsets = [0, 64], sizes = [1, 64], strides = [1, 1]} : vector<1x256xf32> to vector<1x64xf32>
    %82 = vector.extract_strided_slice %79 {offsets = [0, 128], sizes = [1, 64], strides = [1, 1]} : vector<1x256xf32> to vector<1x64xf32>
    %83 = vector.extract_strided_slice %79 {offsets = [0, 192], sizes = [1, 64], strides = [1, 1]} : vector<1x256xf32> to vector<1x64xf32>
    %84 = arith.mulf %81, %71 : vector<1x64xf32>
    %85 = arith.mulf %80, %82 : vector<1x64xf32>
    %86 = arith.addf %84, %85 : vector<1x64xf32>
    %87 = math.tanh %86 : vector<1x64xf32>
    %88 = arith.mulf %83, %87 : vector<1x64xf32>
    %cst_17 = arith.constant dense<0.000000e+00> : vector<1x256xf32>
    %89 = tpu.matmul %88, %13, %cst_17 {dimension_numbers = #tpu.dot_dimension_numbers<[1], [0], [0], [1], [0, 0, 1, 1], [], []>} : vector<1x64xf32>, vector<64x256xf32>, vector<1x256xf32> -> vector<1x256xf32>
    %90 = vector.extract_strided_slice %19 {offsets = [4, 0], sizes = [1, 256], strides = [1, 1]} : vector<8x256xf32> to vector<1x256xf32>
    %91 = arith.addf %89, %90 : vector<1x256xf32>
    %92 = math.tanh %91 : vector<1x256xf32>
    %93 = arith.mulf %92, %8 : vector<1x256xf32>
    %94 = arith.addf %93, %11 : vector<1x256xf32>
    %95 = vector.extract_strided_slice %94 {offsets = [0, 0], sizes = [1, 64], strides = [1, 1]} : vector<1x256xf32> to vector<1x64xf32>
    %96 = vector.extract_strided_slice %94 {offsets = [0, 64], sizes = [1, 64], strides = [1, 1]} : vector<1x256xf32> to vector<1x64xf32>
    %97 = vector.extract_strided_slice %94 {offsets = [0, 128], sizes = [1, 64], strides = [1, 1]} : vector<1x256xf32> to vector<1x64xf32>
    %98 = vector.extract_strided_slice %94 {offsets = [0, 192], sizes = [1, 64], strides = [1, 1]} : vector<1x256xf32> to vector<1x64xf32>
    %99 = arith.mulf %96, %86 : vector<1x64xf32>
    %100 = arith.mulf %95, %97 : vector<1x64xf32>
    %101 = arith.addf %99, %100 : vector<1x64xf32>
    %102 = math.tanh %101 : vector<1x64xf32>
    %103 = arith.mulf %98, %102 : vector<1x64xf32>
    %cst_18 = arith.constant dense<0.000000e+00> : vector<1x256xf32>
    %104 = tpu.matmul %103, %13, %cst_18 {dimension_numbers = #tpu.dot_dimension_numbers<[1], [0], [0], [1], [0, 0, 1, 1], [], []>} : vector<1x64xf32>, vector<64x256xf32>, vector<1x256xf32> -> vector<1x256xf32>
    %105 = vector.extract_strided_slice %19 {offsets = [5, 0], sizes = [1, 256], strides = [1, 1]} : vector<8x256xf32> to vector<1x256xf32>
    %106 = arith.addf %104, %105 : vector<1x256xf32>
    %107 = math.tanh %106 : vector<1x256xf32>
    %108 = arith.mulf %107, %8 : vector<1x256xf32>
    %109 = arith.addf %108, %11 : vector<1x256xf32>
    %110 = vector.extract_strided_slice %109 {offsets = [0, 0], sizes = [1, 64], strides = [1, 1]} : vector<1x256xf32> to vector<1x64xf32>
    %111 = vector.extract_strided_slice %109 {offsets = [0, 64], sizes = [1, 64], strides = [1, 1]} : vector<1x256xf32> to vector<1x64xf32>
    %112 = vector.extract_strided_slice %109 {offsets = [0, 128], sizes = [1, 64], strides = [1, 1]} : vector<1x256xf32> to vector<1x64xf32>
    %113 = vector.extract_strided_slice %109 {offsets = [0, 192], sizes = [1, 64], strides = [1, 1]} : vector<1x256xf32> to vector<1x64xf32>
    %114 = arith.mulf %111, %101 : vector<1x64xf32>
    %115 = arith.mulf %110, %112 : vector<1x64xf32>
    %116 = arith.addf %114, %115 : vector<1x64xf32>
    %117 = math.tanh %116 : vector<1x64xf32>
    %118 = arith.mulf %113, %117 : vector<1x64xf32>
    %cst_19 = arith.constant dense<0.000000e+00> : vector<1x256xf32>
    %119 = tpu.matmul %118, %13, %cst_19 {dimension_numbers = #tpu.dot_dimension_numbers<[1], [0], [0], [1], [0, 0, 1, 1], [], []>} : vector<1x64xf32>, vector<64x256xf32>, vector<1x256xf32> -> vector<1x256xf32>
    %120 = vector.extract_strided_slice %19 {offsets = [6, 0], sizes = [1, 256], strides = [1, 1]} : vector<8x256xf32> to vector<1x256xf32>
    %121 = arith.addf %119, %120 : vector<1x256xf32>
    %122 = math.tanh %121 : vector<1x256xf32>
    %123 = arith.mulf %122, %8 : vector<1x256xf32>
    %124 = arith.addf %123, %11 : vector<1x256xf32>
    %125 = vector.extract_strided_slice %124 {offsets = [0, 0], sizes = [1, 64], strides = [1, 1]} : vector<1x256xf32> to vector<1x64xf32>
    %126 = vector.extract_strided_slice %124 {offsets = [0, 64], sizes = [1, 64], strides = [1, 1]} : vector<1x256xf32> to vector<1x64xf32>
    %127 = vector.extract_strided_slice %124 {offsets = [0, 128], sizes = [1, 64], strides = [1, 1]} : vector<1x256xf32> to vector<1x64xf32>
    %128 = vector.extract_strided_slice %124 {offsets = [0, 192], sizes = [1, 64], strides = [1, 1]} : vector<1x256xf32> to vector<1x64xf32>
    %129 = arith.mulf %126, %116 : vector<1x64xf32>
    %130 = arith.mulf %125, %127 : vector<1x64xf32>
    %131 = arith.addf %129, %130 : vector<1x64xf32>
    %132 = math.tanh %131 : vector<1x64xf32>
    %133 = arith.mulf %128, %132 : vector<1x64xf32>
    %cst_20 = arith.constant dense<0.000000e+00> : vector<1x256xf32>
    %134 = tpu.matmul %133, %13, %cst_20 {dimension_numbers = #tpu.dot_dimension_numbers<[1], [0], [0], [1], [0, 0, 1, 1], [], []>} : vector<1x64xf32>, vector<64x256xf32>, vector<1x256xf32> -> vector<1x256xf32>
    %135 = vector.extract_strided_slice %19 {offsets = [7, 0], sizes = [1, 256], strides = [1, 1]} : vector<8x256xf32> to vector<1x256xf32>
    %136 = arith.addf %134, %135 : vector<1x256xf32>
    %137 = math.tanh %136 : vector<1x256xf32>
    %138 = arith.mulf %137, %8 : vector<1x256xf32>
    %139 = arith.addf %138, %11 : vector<1x256xf32>
    %140 = vector.extract_strided_slice %139 {offsets = [0, 0], sizes = [1, 64], strides = [1, 1]} : vector<1x256xf32> to vector<1x64xf32>
    %141 = vector.extract_strided_slice %139 {offsets = [0, 64], sizes = [1, 64], strides = [1, 1]} : vector<1x256xf32> to vector<1x64xf32>
    %142 = vector.extract_strided_slice %139 {offsets = [0, 128], sizes = [1, 64], strides = [1, 1]} : vector<1x256xf32> to vector<1x64xf32>
    %143 = vector.extract_strided_slice %139 {offsets = [0, 192], sizes = [1, 64], strides = [1, 1]} : vector<1x256xf32> to vector<1x64xf32>
    %144 = arith.mulf %141, %131 : vector<1x64xf32>
    %145 = arith.mulf %140, %142 : vector<1x64xf32>
    %146 = arith.addf %144, %145 : vector<1x64xf32>
    %147 = math.tanh %146 : vector<1x64xf32>
    %148 = arith.mulf %143, %147 : vector<1x64xf32>
    %cst_21 = arith.constant dense<0.000000e+00> : vector<1x256xf32>
    %149 = tpu.matmul %148, %13, %cst_21 {dimension_numbers = #tpu.dot_dimension_numbers<[1], [0], [0], [1], [0, 0, 1, 1], [], []>} : vector<1x64xf32>, vector<64x256xf32>, vector<1x256xf32> -> vector<1x256xf32>
    %150 = arith.addf %149, %14 : vector<1x256xf32>
    %151 = math.tanh %150 : vector<1x256xf32>
    %152 = arith.mulf %151, %8 : vector<1x256xf32>
    %153 = arith.addf %152, %11 : vector<1x256xf32>
    %154 = vector.extract_strided_slice %153 {offsets = [0, 0], sizes = [1, 64], strides = [1, 1]} : vector<1x256xf32> to vector<1x64xf32>
    %155 = vector.extract_strided_slice %153 {offsets = [0, 64], sizes = [1, 64], strides = [1, 1]} : vector<1x256xf32> to vector<1x64xf32>
    %156 = vector.extract_strided_slice %153 {offsets = [0, 128], sizes = [1, 64], strides = [1, 1]} : vector<1x256xf32> to vector<1x64xf32>
    %157 = vector.extract_strided_slice %153 {offsets = [0, 192], sizes = [1, 64], strides = [1, 1]} : vector<1x256xf32> to vector<1x64xf32>
    %158 = arith.mulf %155, %146 : vector<1x64xf32>
    %159 = arith.mulf %154, %156 : vector<1x64xf32>
    %160 = arith.addf %158, %159 : vector<1x64xf32>
    %161 = math.tanh %160 : vector<1x64xf32>
    %162 = arith.mulf %157, %161 : vector<1x64xf32>
    %c32_i32_22 = arith.constant 32 : i32
    %163 = vector.broadcast %c32_i32_22 : i32 to vector<1x64xi32>
    %164 = arith.cmpi sge, %12, %163 : vector<1x64xi32>
    %c64_i32 = arith.constant 64 : i32
    %165 = vector.broadcast %c64_i32 : i32 to vector<1x64xi32>
    %166 = arith.cmpi slt, %12, %165 : vector<1x64xi32>
    %167 = arith.andi %164, %166 : vector<1x64xi1>
    %168 = arith.select %167, %162, %148 : vector<1x64xi1>, vector<1x64xf32>
    %169 = tpu.concatenate %58, %73, %88, %103, %118, %133, %148, %168 in 0 : vector<1x64xf32>, vector<1x64xf32>, vector<1x64xf32>, vector<1x64xf32>, vector<1x64xf32>, vector<1x64xf32>, vector<1x64xf32>, vector<1x64xf32> -> vector<8x64xf32>
    %c0_23 = arith.constant 0 : index
    %c0_24 = arith.constant 0 : index
    %170 = vector.load %arg4[%c0_23, %c0_24] : memref<64x8xf32, #tpu.memory_space<vmem>>, vector<64x8xf32>
    %cst_25 = arith.constant dense<0.000000e+00> : vector<8x8xf32>
    %171 = tpu.matmul %169, %170, %cst_25 {dimension_numbers = #tpu.dot_dimension_numbers<[1], [0], [0], [1], [0, 0, 1, 1], [], []>} : vector<8x64xf32>, vector<64x8xf32>, vector<8x8xf32> -> vector<8x8xf32>
    %c0_26 = arith.constant 0 : index
    %c0_27 = arith.constant 0 : index
    %172 = vector.load %arg5[%c0_26, %c0_27] : memref<1x8xf32, #tpu.memory_space<vmem>>, vector<1x8xf32>
    %173 = vector.broadcast %172 : vector<1x8xf32> to vector<8x8xf32>
    %174 = arith.addf %171, %173 : vector<8x8xf32>
    %c0_28 = arith.constant 0 : index
    %c0_29 = arith.constant 0 : index
    %175 = vector.load %arg6[%c0_28, %c0_29] : memref<8x8xf32, #tpu.memory_space<vmem>>, vector<8x8xf32>
    tpu.vector_store %arg6[%c0_28, %c0_29], %174 {strides = array<i32>} : memref<8x8xf32, #tpu.memory_space<vmem>>, vector<8x8xf32>,
    return
  }
}

</mosaic_0001>

<llo_original>
// kernel: tpu_custom_call.1
$region0: #{tpu_custom_call.1}
  #allocation0 [shape = 'u32[]', space=smem, size = 0x4, offset = 0x4, fixed_abs, tag = 'smem constant byte address 0x4 - core index']
  #allocation1 [shape = 'u32[72,128]{1,0:T(1,128)}', space=vmem, size = 0x9000, scoped, tag = 'internal scratch']
  %s0 = inlined_call_operand.vmem [shape: f32[8,16], index: 0, kind: input, shape index: {}]
  %s1 = inlined_call_operand.vmem [shape: f32[16,256], index: 1, kind: input, shape index: {}]
  %s2 = inlined_call_operand.hbm [shape: f32[64,256], index: 2, kind: input, shape index: {}]
  %s3 = inlined_call_operand.vmem [shape: f32[1,256], index: 3, kind: input, shape index: {}]
  %s4 = inlined_call_operand.vmem [shape: f32[64,8], index: 4, kind: input, shape index: {}]
  %s5 = inlined_call_operand.vmem [shape: f32[1,8], index: 5, kind: input, shape index: {}]
  %s6 = inlined_call_operand.hbm [shape: f32[8,8], index: 6, kind: output, shape index: {}]
  %s7 = sld [smem:[#allocation0]]
  $region38: #{tpu_custom_call.1} parent=0
    _
  %s9 = ssub.s32 1, %s7
  %s10 = scalar_select 0, %s9, %s7
  $region1: #{tpu_custom_call.1} parent=0
    #allocation2 [shape = 'u8[65536]{0}', space=vmem, size = 0x10000, scoped, tag = 'input window, operand 2, single buffered']
    #allocation3 [shape = 's32[1]{0}', space=sflag, size = 0x4, scoped, tag = 'scoped memory for tpu_custom_call.1']
    #allocation4 [shape = 's32[1]{0}', space=sflag, size = 0x4, scoped, tag = 'scoped memory for tpu_custom_call.1']
    #allocation5 [shape = 'u8[4096]{0}', space=vmem, size = 0x1000, scoped, tag = 'output window, operand 0, single buffered']
    %11 = vsyncpa [#allocation3], 0
    %12 = vsyncpa [#allocation4], 0
    // Predicated region
    $region2: #{tpu_custom_call.1} parent=1 // pred_check
      _
    $region3: #{tpu_custom_call.1} parent=1 // pred_check_branch
      %14 = sbr.rel (0) target = $region5
    $region4: #{tpu_custom_call.1} parent=1 // pred_region
      _
    $region5: #{tpu_custom_call.1} parent=1 // pred_fallthru
      _
    // Predicated region
    $region6: #{tpu_custom_call.1} parent=1 // pred_check
      _
    $region7: #{tpu_custom_call.1} parent=1 // pred_check_branch
      %16 = sbr.rel (0) target = $region9
    $region8: #{tpu_custom_call.1} parent=1 // pred_region
      _
    $region9: #{tpu_custom_call.1} parent=1 // pred_fallthru
      _
    // Predicated region
    $region10: #{tpu_custom_call.1} parent=1 // pred_check
      _
    $region11: #{tpu_custom_call.1} parent=1 // pred_check_branch
      %18 = sbr.rel (0) target = $region13
    $region12: #{tpu_custom_call.1} parent=1 // pred_region
      %20 = vsyncadd [#allocation3], 0
      %s21 = sshll.u32 %s2, 4
      %s22 = int_to_ptr.hbm [resolvable:$true] %s21
      %s23 = sshll.u32 [#allocation2], 4
      %s24 = int_to_ptr.vmem [resolvable:$true] %s23
      %29 = dma.hbm_to_vmem [thread:$0]  %s22, 2048, %s24, [#allocation3], 256, 256, 16
    $region13: #{tpu_custom_call.1} parent=1 // pred_fallthru
      _
    // Predicated region
    $region14: #{tpu_custom_call.1} parent=1 // pred_check
      _
    $region15: #{tpu_custom_call.1} parent=1 // pred_check_branch
      %31 = sbr.rel (0) target = $region17
    $region16: #{tpu_custom_call.1} parent=1 // pred_region
      _
    $region17: #{tpu_custom_call.1} parent=1 // pred_fallthru
      _
    // Predicated region
    $region18: #{tpu_custom_call.1} parent=1 // pred_check
      _
    $region19: #{tpu_custom_call.1} parent=1 // pred_check_branch
      %33 = sbr.rel (0) target = $region21
    $region20: #{tpu_custom_call.1} parent=1 // pred_region
      _
    $region21: #{tpu_custom_call.1} parent=1 // pred_fallthru
      _
    // Predicated region
    $region22: #{tpu_custom_call.1} parent=1 // pred_check
      _
    $region23: #{tpu_custom_call.1} parent=1 // pred_check_branch
      %35 = sbr.rel (0) target = $region25
    $region24: #{tpu_custom_call.1} parent=1 // pred_region
      _
    $region25: #{tpu_custom_call.1} parent=1 // pred_fallthru
      _
    // Predicated region
    $region26: #{tpu_custom_call.1} parent=1 // pred_check
      _
    $region27: #{tpu_custom_call.1} parent=1 // pred_check_branch
      %37 = sbr.rel (0) target = $region29
    $region28: #{tpu_custom_call.1} parent=1 // pred_region
      %39 = dma.done [#allocation3], 2048
    $region29: #{tpu_custom_call.1} parent=1 // pred_fallthru
      _
    %v40 = vlaneseq
    %v41 = vand.u32 %v40, 127
    %v42 = vadd.s32 %v41, 128
    %vm43 = vcmp.ge.s32.totalorder %v41, 128
    %vm44 = vcmp.ge.s32.totalorder %v42, 128
    %vm45 = vcmp.lt.s32.totalorder %v41, 192
    %vm46 = vcmp.lt.s32.totalorder %v42, 192
    %vm47 = vmand %vm43, %vm45
    %vm48 = vmand %vm44, %vm46
    %v49 = vsel %vm47, 1.0, 0.5
    %v50 = vsel %vm48, 1.0, 0.5
    %v51 = vsel %vm47, 0.0, 0.5
    %v52 = vsel %vm48, 0.0, 0.5
    %v53 = vld [vmem:[#allocation2] sm:$0xff]
    %v54 = vld [vmem:[#allocation2 + $0x8] sm:$0xff]
    %v55 = vld [vmem:[#allocation2 + $0x10] sm:$0xff]
    %v56 = vld [vmem:[#allocation2 + $0x18] sm:$0xff]
    %v57 = vld [vmem:[#allocation2 + $0x20] sm:$0xff]
    %v58 = vld [vmem:[#allocation2 + $0x28] sm:$0xff]
    %v59 = vld [vmem:[#allocation2 + $0x30] sm:$0xff]
    %v60 = vld [vmem:[#allocation2 + $0x38] sm:$0xff]
    %v61 = vld [vmem:[#allocation2 + $0x40] sm:$0xff]
    %v62 = vld [vmem:[#allocation2 + $0x48] sm:$0xff]
    %v63 = vld [vmem:[#allocation2 + $0x50] sm:$0xff]
    %v64 = vld [vmem:[#allocation2 + $0x58] sm:$0xff]
    %v65 = vld [vmem:[#allocation2 + $0x60] sm:$0xff]
    %v66 = vld [vmem:[#allocation2 + $0x68] sm:$0xff]
    %v67 = vld [vmem:[#allocation2 + $0x70] sm:$0xff]
    %v68 = vld [vmem:[#allocation2 + $0x78] sm:$0xff]
    %v69 = vld [vmem:[%s3] sm:$0x3]
    %v70 = vld [vmem:[%s0] sm:$0xff]
    %v71 = vld [vmem:[%s1] sm:$0xff]
    %v72 = vld [vmem:[%s1 + $0x8] sm:$0xff]
    %v73 = vld [vmem:[%s1 + $0x10] sm:$0xff]
    %v74 = vld [vmem:[%s1 + $0x18] sm:$0xff]
    %v76 = vperm.slane %v69, 0
    %v77 = vperm.slane %v69, 1
    %vm80 = vcmask 130048
    %v82 = vsel %vm80, %v70, 0
    %84 = vmatpush.msra.mxu0 0.0
    %85 = vmatpush.msra.mxu0 0.0
    %86 = vmatpush.msra.mxu0 0.0
    %87 = vmatpush.msra.mxu0 0.0
    %88 = vmatpush.msra.mxu0 0.0
    %89 = vmatpush.msra.mxu0 0.0
    %90 = vmatpush.msra.mxu0 0.0
    %91 = vmatpush.msra.mxu0 0.0
    %92 = vmatpush.msra.mxu0 0.0
    %93 = vmatpush.msra.mxu0 0.0
    %94 = vmatpush.msra.mxu0 0.0
    %95 = vmatpush.msra.mxu0 0.0
    %96 = vmatpush.msra.mxu0 0.0
    %97 = vmatpush.msra.mxu0 0.0
    %98 = vmatpush.msra.mxu0 %v73
    %99 = vmatpush.msra.mxu0 %v71
    %100 = vmatmul.f32.gmra.mxu0 %v82
    %v101 = vpop.f32.mrf.mxu0
    %v102 = vadd.f32 %v76, %v101
    %103 = vdwg.mxu0
    %104 = vmatpush.msra.mxu0 0.0
    %105 = vmatpush.msra.mxu0 0.0
    %106 = vmatpush.msra.mxu0 0.0
    %107 = vmatpush.msra.mxu0 0.0
    %108 = vmatpush.msra.mxu0 0.0
    %109 = vmatpush.msra.mxu0 0.0
    %110 = vmatpush.msra.mxu0 0.0
    %111 = vmatpush.msra.mxu0 0.0
    %112 = vmatpush.msra.mxu0 0.0
    %113 = vmatpush.msra.mxu0 0.0
    %114 = vmatpush.msra.mxu0 0.0
    %115 = vmatpush.msra.mxu0 0.0
    %116 = vmatpush.msra.mxu0 0.0
    %117 = vmatpush.msra.mxu0 0.0
    %118 = vmatpush.msra.mxu0 %v74
    %119 = vmatpush.msra.mxu0 %v72
    %120 = vmatmul.f32.gmra.mxu0 %v82
    %v121 = vpop.f32.mrf.mxu0
    %v122 = vadd.f32 %v77, %v121
    %123 = vdwg.mxu0
    %vm124 = vcmask 523264
    %v126 = vsel %vm124, 0.0, 0
    %128 = vmatpush.msra.mxu0 0.0
    %129 = vmatpush.msra.mxu0 0.0
    %130 = vmatpush.msra.mxu0 0.0
    %131 = vmatpush.msra.mxu0 0.0
    %132 = vmatpush.msra.mxu0 0.0
    %133 = vmatpush.msra.mxu0 0.0
    %134 = vmatpush.msra.mxu0 0.0
    %135 = vmatpush.msra.mxu0 0.0
    %136 = vmatpush.msra.mxu0 %v67
    %137 = vmatpush.msra.mxu0 %v65
    %138 = vmatpush.msra.mxu0 %v63
    %139 = vmatpush.msra.mxu0 %v61
    %140 = vmatpush.msra.mxu0 %v59
    %141 = vmatpush.msra.mxu0 %v57
    %142 = vmatpush.msra.mxu0 %v55
    %143 = vmatpush.msra.mxu0 %v53
    %144 = vmatmul.f32.gmra.mxu0 %v126
    %v145 = vpop.f32.mrf.mxu0
    %v146 = vadd.f32 %v102, %v145
    %147 = vdwg.mxu0
    %148 = vmatpush.msra.mxu0 0.0
    %149 = vmatpush.msra.mxu0 0.0
    %150 = vmatpush.msra.mxu0 0.0
    %151 = vmatpush.msra.mxu0 0.0
    %152 = vmatpush.msra.mxu0 0.0
    %153 = vmatpush.msra.mxu0 0.0
    %154 = vmatpush.msra.mxu0 0.0
    %155 = vmatpush.msra.mxu0 0.0
    %156 = vmatpush.msra.mxu0 %v68
    %157 = vmatpush.msra.mxu0 %v66
    %158 = vmatpush.msra.mxu0 %v64
    %159 = vmatpush.msra.mxu0 %v62
    %160 = vmatpush.msra.mxu0 %v60
    %161 = vmatpush.msra.mxu0 %v58
    %162 = vmatpush.msra.mxu0 %v56
    %163 = vmatpush.msra.mxu0 %v54
    %164 = vmatmul.f32.gmra.mxu0 %v126
    %v165 = vpop.f32.mrf.mxu0
    %v166 = vadd.f32 %v122, %v165
    %167 = vdwg.mxu0
    %v168 = vtanh.pop %v146
    %v169 = vtanh.pop %v166
    %v170 = vmul.f32 %v168, %v49
    %v171 = vmul.f32 %v169, %v50
    %v172 = vadd.f32 %v170, %v51
    %v173 = vadd.f32 %v171, %v52
    %v174 = vmul.f32 %v172, 0.0
    %v175 = vmul.f32 %v172, %v173
    %177 = vrot.lane.b32.xlu0 %v175, 64
    %v178 = vpop.permute.xlu0 %177
    %v180 = vadd.f32 %v174, %v178
    %v181 = vtanh.pop %v180
    %v182 = vmul.f32 %v173, %v181
    %vm183 = vcmp.ge.s32.totalorder %v41, 0
    %vm184 = vcmp.lt.s32.totalorder %v41, 32
    %vm185 = vmand %vm183, %vm184
    %187 = vrot.lane.b32.xlu0 %v182, 64
    %v188 = vpop.permute.xlu0 %187
    %v190 = vsel %vm185, %v188, 0.0
    %192 = vrot.lane.b32.xlu0 %v180, 64
    %v193 = vpop.permute.xlu0 %192
    %v195 = vsel %vm185, %v193, 0.0
    %v198 = vrot.slane %v102, 1
    %v199 = vrot.slane %v122, 1
    %v203 = vsel %vm124, %v190, 0
    %205 = vmatpush.msra.mxu0 0.0
    %206 = vmatpush.msra.mxu0 0.0
    %207 = vmatpush.msra.mxu0 0.0
    %208 = vmatpush.msra.mxu0 0.0
    %209 = vmatpush.msra.mxu0 0.0
    %210 = vmatpush.msra.mxu0 0.0
    %211 = vmatpush.msra.mxu0 0.0
    %212 = vmatpush.msra.mxu0 0.0
    %213 = vmatpush.msra.mxu0 %v67
    %214 = vmatpush.msra.mxu0 %v65
    %215 = vmatpush.msra.mxu0 %v63
    %216 = vmatpush.msra.mxu0 %v61
    %217 = vmatpush.msra.mxu0 %v59
    %218 = vmatpush.msra.mxu0 %v57
    %219 = vmatpush.msra.mxu0 %v55
    %220 = vmatpush.msra.mxu0 %v53
    %221 = vmatmul.f32.gmra.mxu0 %v203
    %v222 = vpop.f32.mrf.mxu0
    %v223 = vadd.f32 %v198, %v222
    %224 = vdwg.mxu0
    %225 = vmatpush.msra.mxu0 0.0
    %226 = vmatpush.msra.mxu0 0.0
    %227 = vmatpush.msra.mxu0 0.0
    %228 = vmatpush.msra.mxu0 0.0
    %229 = vmatpush.msra.mxu0 0.0
    %230 = vmatpush.msra.mxu0 0.0
    %231 = vmatpush.msra.mxu0 0.0
    %232 = vmatpush.msra.mxu0 0.0
    %233 = vmatpush.msra.mxu0 %v68
    %234 = vmatpush.msra.mxu0 %v66
    %235 = vmatpush.msra.mxu0 %v64
    %236 = vmatpush.msra.mxu0 %v62
    %237 = vmatpush.msra.mxu0 %v60
    %238 = vmatpush.msra.mxu0 %v58
    %239 = vmatpush.msra.mxu0 %v56
    %240 = vmatpush.msra.mxu0 %v54
    %241 = vmatmul.f32.gmra.mxu0 %v203
    %v242 = vpop.f32.mrf.mxu0
    %v243 = vadd.f32 %v199, %v242
    %244 = vdwg.mxu0
    %v245 = vtanh.pop %v223
    %v246 = vtanh.pop %v243
    %v247 = vmul.f32 %v245, %v49
    %v248 = vmul.f32 %v246, %v50
    %v249 = vadd.f32 %v247, %v51
    %v250 = vadd.f32 %v248, %v52
    %252 = vrot.lane.b32.xlu0 %v195, 64
    %v253 = vpop.permute.xlu0 %252
    %v255 = vmul.f32 %v249, %v253
    %v256 = vmul.f32 %v249, %v250
    %258 = vrot.lane.b32.xlu0 %v256, 64
    %v259 = vpop.permute.xlu0 %258
    %v261 = vadd.f32 %v255, %v259
    %v262 = vtanh.pop %v261
    %v263 = vmul.f32 %v250, %v262
    %265 = vrot.lane.b32.xlu0 %v263, 64
    %v266 = vpop.permute.xlu0 %265
    %v267 = vrot.slane %v102, 2
    %v268 = vrot.slane %v122, 2
    %v271 = vsel %vm124, %v266, 0
    %273 = vmatpush.msra.mxu0 0.0
    %274 = vmatpush.msra.mxu0 0.0
    %275 = vmatpush.msra.mxu0 0.0
    %276 = vmatpush.msra.mxu0 0.0
    %277 = vmatpush.msra.mxu0 0.0
    %278 = vmatpush.msra.mxu0 0.0
    %279 = vmatpush.msra.mxu0 0.0
    %280 = vmatpush.msra.mxu0 0.0
    %281 = vmatpush.msra.mxu0 %v67
    %282 = vmatpush.msra.mxu0 %v65
    %283 = vmatpush.msra.mxu0 %v63
    %284 = vmatpush.msra.mxu0 %v61
    %285 = vmatpush.msra.mxu0 %v59
    %286 = vmatpush.msra.mxu0 %v57
    %287 = vmatpush.msra.mxu0 %v55
    %288 = vmatpush.msra.mxu0 %v53
    %289 = vmatmul.f32.gmra.mxu0 %v271
    %v290 = vpop.f32.mrf.mxu0
    %v291 = vadd.f32 %v267, %v290
    %292 = vdwg.mxu0
    %293 = vmatpush.msra.mxu0 0.0
    %294 = vmatpush.msra.mxu0 0.0
    %295 = vmatpush.msra.mxu0 0.0
    %296 = vmatpush.msra.mxu0 0.0
    %297 = vmatpush.msra.mxu0 0.0
    %298 = vmatpush.msra.mxu0 0.0
    %299 = vmatpush.msra.mxu0 0.0
    %300 = vmatpush.msra.mxu0 0.0
    %301 = vmatpush.msra.mxu0 %v68
    %302 = vmatpush.msra.mxu0 %v66
    %303 = vmatpush.msra.mxu0 %v64
    %304 = vmatpush.msra.mxu0 %v62
    %305 = vmatpush.msra.mxu0 %v60
    %306 = vmatpush.msra.mxu0 %v58
    %307 = vmatpush.msra.mxu0 %v56
    %308 = vmatpush.msra.mxu0 %v54
    %309 = vmatmul.f32.gmra.mxu0 %v271
    %v310 = vpop.f32.mrf.mxu0
    %v311 = vadd.f32 %v268, %v310
    %312 = vdwg.mxu0
    %v313 = vtanh.pop %v291
    %v314 = vtanh.pop %v311
    %v315 = vmul.f32 %v313, %v49
    %v316 = vmul.f32 %v314, %v50
    %v317 = vadd.f32 %v315, %v51
    %v318 = vadd.f32 %v316, %v52
    %v319 = vmul.f32 %v317, %v261
    %v320 = vmul.f32 %v317, %v318
    %322 = vrot.lane.b32.xlu0 %v320, 64
    %v323 = vpop.permute.xlu0 %322
    %v325 = vadd.f32 %v319, %v323
    %v326 = vtanh.pop %v325
    %v327 = vmul.f32 %v318, %v326
    %329 = vrot.lane.b32.xlu0 %v327, 64
    %v330 = vpop.permute.xlu0 %329
    %v331 = vrot.slane %v102, 3
    %v332 = vrot.slane %v122, 3
    %v335 = vsel %vm124, %v330, 0
    %337 = vmatpush.msra.mxu0 0.0
    %338 = vmatpush.msra.mxu0 0.0
    %339 = vmatpush.msra.mxu0 0.0
    %340 = vmatpush.msra.mxu0 0.0
    %341 = vmatpush.msra.mxu0 0.0
    %342 = vmatpush.msra.mxu0 0.0
    %343 = vmatpush.msra.mxu0 0.0
    %344 = vmatpush.msra.mxu0 0.0
    %345 = vmatpush.msra.mxu0 %v67
    %346 = vmatpush.msra.mxu0 %v65
    %347 = vmatpush.msra.mxu0 %v63
    %348 = vmatpush.msra.mxu0 %v61
    %349 = vmatpush.msra.mxu0 %v59
    %350 = vmatpush.msra.mxu0 %v57
    %351 = vmatpush.msra.mxu0 %v55
    %352 = vmatpush.msra.mxu0 %v53
    %353 = vmatmul.f32.gmra.mxu0 %v335
    %v354 = vpop.f32.mrf.mxu0
    %v355 = vadd.f32 %v331, %v354
    %356 = vdwg.mxu0
    %357 = vmatpush.msra.mxu0 0.0
    %358 = vmatpush.msra.mxu0 0.0
    %359 = vmatpush.msra.mxu0 0.0
    %360 = vmatpush.msra.mxu0 0.0
    %361 = vmatpush.msra.mxu0 0.0
    %362 = vmatpush.msra.mxu0 0.0
    %363 = vmatpush.msra.mxu0 0.0
    %364 = vmatpush.msra.mxu0 0.0
    %365 = vmatpush.msra.mxu0 %v68
    %366 = vmatpush.msra.mxu0 %v66
    %367 = vmatpush.msra.mxu0 %v64
    %368 = vmatpush.msra.mxu0 %v62
    %369 = vmatpush.msra.mxu0 %v60
    %370 = vmatpush.msra.mxu0 %v58
    %371 = vmatpush.msra.mxu0 %v56
    %372 = vmatpush.msra.mxu0 %v54
    %373 = vmatmul.f32.gmra.mxu0 %v335
    %v374 = vpop.f32.mrf.mxu0
    %v375 = vadd.f32 %v332, %v374
    %376 = vdwg.mxu0
    %v377 = vtanh.pop %v355
    %v378 = vtanh.pop %v375
    %v379 = vmul.f32 %v377, %v49
    %v380 = vmul.f32 %v378, %v50
    %v381 = vadd.f32 %v379, %v51
    %v382 = vadd.f32 %v380, %v52
    %v383 = vmul.f32 %v381, %v325
    %v384 = vmul.f32 %v381, %v382
    %386 = vrot.lane.b32.xlu0 %v384, 64
    %v387 = vpop.permute.xlu0 %386
    %v389 = vadd.f32 %v383, %v387
    %v390 = vtanh.pop %v389
    %v391 = vmul.f32 %v382, %v390
    %393 = vrot.lane.b32.xlu0 %v391, 64
    %v394 = vpop.permute.xlu0 %393
    %v395 = vrot.slane %v102, 4
    %v396 = vrot.slane %v122, 4
    %v399 = vsel %vm124, %v394, 0
    %401 = vmatpush.msra.mxu0 0.0
    %402 = vmatpush.msra.mxu0 0.0
    %403 = vmatpush.msra.mxu0 0.0
    %404 = vmatpush.msra.mxu0 0.0
    %405 = vmatpush.msra.mxu0 0.0
    %406 = vmatpush.msra.mxu0 0.0
    %407 = vmatpush.msra.mxu0 0.0
    %408 = vmatpush.msra.mxu0 0.0
    %409 = vmatpush.msra.mxu0 %v67
    %410 = vmatpush.msra.mxu0 %v65
    %411 = vmatpush.msra.mxu0 %v63
    %412 = vmatpush.msra.mxu0 %v61
    %413 = vmatpush.msra.mxu0 %v59
    %414 = vmatpush.msra.mxu0 %v57
    %415 = vmatpush.msra.mxu0 %v55
    %416 = vmatpush.msra.mxu0 %v53
    %417 = vmatmul.f32.gmra.mxu0 %v399
    %v418 = vpop.f32.mrf.mxu0
    %v419 = vadd.f32 %v395, %v418
    %420 = vdwg.mxu0
    %421 = vmatpush.msra.mxu0 0.0
    %422 = vmatpush.msra.mxu0 0.0
    %423 = vmatpush.msra.mxu0 0.0
    %424 = vmatpush.msra.mxu0 0.0
    %425 = vmatpush.msra.mxu0 0.0
    %426 = vmatpush.msra.mxu0 0.0
    %427 = vmatpush.msra.mxu0 0.0
    %428 = vmatpush.msra.mxu0 0.0
    %429 = vmatpush.msra.mxu0 %v68
    %430 = vmatpush.msra.mxu0 %v66
    %431 = vmatpush.msra.mxu0 %v64
    %432 = vmatpush.msra.mxu0 %v62
    %433 = vmatpush.msra.mxu0 %v60
    %434 = vmatpush.msra.mxu0 %v58
    %435 = vmatpush.msra.mxu0 %v56
    %436 = vmatpush.msra.mxu0 %v54
    %437 = vmatmul.f32.gmra.mxu0 %v399
    %v438 = vpop.f32.mrf.mxu0
    %v439 = vadd.f32 %v396, %v438
    %440 = vdwg.mxu0
    %v441 = vtanh.pop %v419
    %v442 = vtanh.pop %v439
    %v443 = vmul.f32 %v441, %v49
    %v444 = vmul.f32 %v442, %v50
    %v445 = vadd.f32 %v443, %v51
    %v446 = vadd.f32 %v444, %v52
    %v447 = vmul.f32 %v445, %v389
    %v448 = vmul.f32 %v445, %v446
    %450 = vrot.lane.b32.xlu0 %v448, 64
    %v451 = vpop.permute.xlu0 %450
    %v453 = vadd.f32 %v447, %v451
    %v454 = vtanh.pop %v453
    %v455 = vmul.f32 %v446, %v454
    %457 = vrot.lane.b32.xlu0 %v455, 64
    %v458 = vpop.permute.xlu0 %457
    %v459 = vrot.slane %v102, 5
    %v460 = vrot.slane %v122, 5
    %v463 = vsel %vm124, %v458, 0
    %465 = vmatpush.msra.mxu0 0.0
    %466 = vmatpush.msra.mxu0 0.0
    %467 = vmatpush.msra.mxu0 0.0
    %468 = vmatpush.msra.mxu0 0.0
    %469 = vmatpush.msra.mxu0 0.0
    %470 = vmatpush.msra.mxu0 0.0
    %471 = vmatpush.msra.mxu0 0.0
    %472 = vmatpush.msra.mxu0 0.0
    %473 = vmatpush.msra.mxu0 %v67
    %474 = vmatpush.msra.mxu0 %v65
    %475 = vmatpush.msra.mxu0 %v63
    %476 = vmatpush.msra.mxu0 %v61
    %477 = vmatpush.msra.mxu0 %v59
    %478 = vmatpush.msra.mxu0 %v57
    %479 = vmatpush.msra.mxu0 %v55
    %480 = vmatpush.msra.mxu0 %v53
    %481 = vmatmul.f32.gmra.mxu0 %v463
    %v482 = vpop.f32.mrf.mxu0
    %v483 = vadd.f32 %v459, %v482
    %484 = vdwg.mxu0
    %485 = vmatpush.msra.mxu0 0.0
    %486 = vmatpush.msra.mxu0 0.0
    %487 = vmatpush.msra.mxu0 0.0
    %488 = vmatpush.msra.mxu0 0.0
    %489 = vmatpush.msra.mxu0 0.0
    %490 = vmatpush.msra.mxu0 0.0
    %491 = vmatpush.msra.mxu0 0.0
    %492 = vmatpush.msra.mxu0 0.0
    %493 = vmatpush.msra.mxu0 %v68
    %494 = vmatpush.msra.mxu0 %v66
    %495 = vmatpush.msra.mxu0 %v64
    %496 = vmatpush.msra.mxu0 %v62
    %497 = vmatpush.msra.mxu0 %v60
    %498 = vmatpush.msra.mxu0 %v58
    %499 = vmatpush.msra.mxu0 %v56
    %500 = vmatpush.msra.mxu0 %v54
    %501 = vmatmul.f32.gmra.mxu0 %v463
    %v502 = vpop.f32.mrf.mxu0
    %v503 = vadd.f32 %v460, %v502
    %504 = vdwg.mxu0
    %v505 = vtanh.pop %v483
    %v506 = vtanh.pop %v503
    %v507 = vmul.f32 %v505, %v49
    %v508 = vmul.f32 %v506, %v50
    %v509 = vadd.f32 %v507, %v51
    %v510 = vadd.f32 %v508, %v52
    %v511 = vmul.f32 %v509, %v453
    %v512 = vmul.f32 %v509, %v510
    %514 = vrot.lane.b32.xlu0 %v512, 64
    %v515 = vpop.permute.xlu0 %514
    %v517 = vadd.f32 %v511, %v515
    %v518 = vtanh.pop %v517
    %v519 = vmul.f32 %v510, %v518
    %521 = vrot.lane.b32.xlu0 %v519, 64
    %v522 = vpop.permute.xlu0 %521
    %v523 = vrot.slane %v102, 6
    %v524 = vrot.slane %v122, 6
    %v527 = vsel %vm124, %v522, 0
    %529 = vmatpush.msra.mxu0 0.0
    %530 = vmatpush.msra.mxu0 0.0
    %531 = vmatpush.msra.mxu0 0.0
    %532 = vmatpush.msra.mxu0 0.0
    %533 = vmatpush.msra.mxu0 0.0
    %534 = vmatpush.msra.mxu0 0.0
    %535 = vmatpush.msra.mxu0 0.0
    %536 = vmatpush.msra.mxu0 0.0
    %537 = vmatpush.msra.mxu0 %v67
    %538 = vmatpush.msra.mxu0 %v65
    %539 = vmatpush.msra.mxu0 %v63
    %540 = vmatpush.msra.mxu0 %v61
    %541 = vmatpush.msra.mxu0 %v59
    %542 = vmatpush.msra.mxu0 %v57
    %543 = vmatpush.msra.mxu0 %v55
    %544 = vmatpush.msra.mxu0 %v53
    %545 = vmatmul.f32.gmra.mxu0 %v527
    %v546 = vpop.f32.mrf.mxu0
    %v547 = vadd.f32 %v523, %v546
    %548 = vdwg.mxu0
    %549 = vmatpush.msra.mxu0 0.0
    %550 = vmatpush.msra.mxu0 0.0
    %551 = vmatpush.msra.mxu0 0.0
    %552 = vmatpush.msra.mxu0 0.0
    %553 = vmatpush.msra.mxu0 0.0
    %554 = vmatpush.msra.mxu0 0.0
    %555 = vmatpush.msra.mxu0 0.0
    %556 = vmatpush.msra.mxu0 0.0
    %557 = vmatpush.msra.mxu0 %v68
    %558 = vmatpush.msra.mxu0 %v66
    %559 = vmatpush.msra.mxu0 %v64
    %560 = vmatpush.msra.mxu0 %v62
    %561 = vmatpush.msra.mxu0 %v60
    %562 = vmatpush.msra.mxu0 %v58
    %563 = vmatpush.msra.mxu0 %v56
    %564 = vmatpush.msra.mxu0 %v54
    %565 = vmatmul.f32.gmra.mxu0 %v527
    %v566 = vpop.f32.mrf.mxu0
    %v567 = vadd.f32 %v524, %v566
    %568 = vdwg.mxu0
    %v569 = vtanh.pop %v547
    %v570 = vtanh.pop %v567
    %v571 = vmul.f32 %v569, %v49
    %v572 = vmul.f32 %v570, %v50
    %v573 = vadd.f32 %v571, %v51
    %v574 = vadd.f32 %v572, %v52
    %v575 = vmul.f32 %v573, %v517
    %v576 = vmul.f32 %v573, %v574
    %578 = vrot.lane.b32.xlu0 %v576, 64
    %v579 = vpop.permute.xlu0 %578
    %v581 = vadd.f32 %v575, %v579
    %v582 = vtanh.pop %v581
    %v583 = vmul.f32 %v574, %v582
    %585 = vrot.lane.b32.xlu0 %v583, 64
    %v586 = vpop.permute.xlu0 %585
    %v587 = vrot.slane %v102, 7
    %v588 = vrot.slane %v122, 7
    %v591 = vsel %vm124, %v586, 0
    %593 = vmatpush.msra.mxu0 0.0
    %594 = vmatpush.msra.mxu0 0.0
    %595 = vmatpush.msra.mxu0 0.0
    %596 = vmatpush.msra.mxu0 0.0
    %597 = vmatpush.msra.mxu0 0.0
    %598 = vmatpush.msra.mxu0 0.0
    %599 = vmatpush.msra.mxu0 0.0
    %600 = vmatpush.msra.mxu0 0.0
    %601 = vmatpush.msra.mxu0 %v67
    %602 = vmatpush.msra.mxu0 %v65
    %603 = vmatpush.msra.mxu0 %v63
    %604 = vmatpush.msra.mxu0 %v61
    %605 = vmatpush.msra.mxu0 %v59
    %606 = vmatpush.msra.mxu0 %v57
    %607 = vmatpush.msra.mxu0 %v55
    %608 = vmatpush.msra.mxu0 %v53
    %609 = vmatmul.f32.gmra.mxu0 %v591
    %v610 = vpop.f32.mrf.mxu0
    %v611 = vadd.f32 %v587, %v610
    %612 = vdwg.mxu0
    %613 = vmatpush.msra.mxu0 0.0
    %614 = vmatpush.msra.mxu0 0.0
    %615 = vmatpush.msra.mxu0 0.0
    %616 = vmatpush.msra.mxu0 0.0
    %617 = vmatpush.msra.mxu0 0.0
    %618 = vmatpush.msra.mxu0 0.0
    %619 = vmatpush.msra.mxu0 0.0
    %620 = vmatpush.msra.mxu0 0.0
    %621 = vmatpush.msra.mxu0 %v68
    %622 = vmatpush.msra.mxu0 %v66
    %623 = vmatpush.msra.mxu0 %v64
    %624 = vmatpush.msra.mxu0 %v62
    %625 = vmatpush.msra.mxu0 %v60
    %626 = vmatpush.msra.mxu0 %v58
    %627 = vmatpush.msra.mxu0 %v56
    %628 = vmatpush.msra.mxu0 %v54
    %629 = vmatmul.f32.gmra.mxu0 %v591
    %v630 = vpop.f32.mrf.mxu0
    %v631 = vadd.f32 %v588, %v630
    %632 = vdwg.mxu0
    %v633 = vtanh.pop %v611
    %v634 = vtanh.pop %v631
    %v635 = vmul.f32 %v633, %v49
    %v636 = vmul.f32 %v634, %v50
    %v637 = vadd.f32 %v635, %v51
    %v638 = vadd.f32 %v636, %v52
    %v639 = vmul.f32 %v637, %v581
    %v640 = vmul.f32 %v637, %v638
    %642 = vrot.lane.b32.xlu0 %v640, 64
    %v643 = vpop.permute.xlu0 %642
    %v645 = vadd.f32 %v639, %v643
    %v646 = vtanh.pop %v645
    %v647 = vmul.f32 %v638, %v646
    %649 = vrot.lane.b32.xlu0 %v647, 64
    %v650 = vpop.permute.xlu0 %649
    %v651 = vsel %vm124, %v650, 0
    %653 = vmatpush.msra.mxu0 0.0
    %654 = vmatpush.msra.mxu0 0.0
    %655 = vmatpush.msra.mxu0 0.0
    %656 = vmatpush.msra.mxu0 0.0
    %657 = vmatpush.msra.mxu0 0.0
    %658 = vmatpush.msra.mxu0 0.0
    %659 = vmatpush.msra.mxu0 0.0
    %660 = vmatpush.msra.mxu0 0.0
    %661 = vmatpush.msra.mxu0 %v67
    %662 = vmatpush.msra.mxu0 %v65
    %663 = vmatpush.msra.mxu0 %v63
    %664 = vmatpush.msra.mxu0 %v61
    %665 = vmatpush.msra.mxu0 %v59
    %666 = vmatpush.msra.mxu0 %v57
    %667 = vmatpush.msra.mxu0 %v55
    %668 = vmatpush.msra.mxu0 %v53
    %669 = vmatmul.f32.gmra.mxu0 %v651
    %v670 = vpop.f32.mrf.mxu0
    %v671 = vadd.f32 %v76, %v670
    %672 = vdwg.mxu0
    %673 = vmatpush.msra.mxu0 0.0
    %674 = vmatpush.msra.mxu0 0.0
    %675 = vmatpush.msra.mxu0 0.0
    %676 = vmatpush.msra.mxu0 0.0
    %677 = vmatpush.msra.mxu0 0.0
    %678 = vmatpush.msra.mxu0 0.0
    %679 = vmatpush.msra.mxu0 0.0
    %680 = vmatpush.msra.mxu0 0.0
    %681 = vmatpush.msra.mxu0 %v68
    %682 = vmatpush.msra.mxu0 %v66
    %683 = vmatpush.msra.mxu0 %v64
    %684 = vmatpush.msra.mxu0 %v62
    %685 = vmatpush.msra.mxu0 %v60
    %686 = vmatpush.msra.mxu0 %v58
    %687 = vmatpush.msra.mxu0 %v56
    %688 = vmatpush.msra.mxu0 %v54
    %689 = vmatmul.f32.gmra.mxu0 %v651
    %v690 = vpop.f32.mrf.mxu0
    %v691 = vadd.f32 %v77, %v690
    %692 = vdwg.mxu0
    %v693 = vtanh.pop %v671
    %v694 = vtanh.pop %v691
    %v695 = vmul.f32 %v693, %v49
    %v696 = vmul.f32 %v694, %v50
    %v697 = vadd.f32 %v695, %v51
    %v698 = vadd.f32 %v696, %v52
    %v699 = vmul.f32 %v697, %v645
    %v700 = vmul.f32 %v697, %v698
    %702 = vrot.lane.b32.xlu0 %v700, 64
    %v703 = vpop.permute.xlu0 %702
    %v705 = vadd.f32 %v699, %v703
    %v706 = vtanh.pop %v705
    %v707 = vmul.f32 %v698, %v706
    %vm708 = vcmp.ge.s32.totalorder %v41, 32
    %vm709 = vcmp.lt.s32.totalorder %v41, 64
    %vm710 = vmand %vm708, %vm709
    %712 = vrot.lane.b32.xlu0 %v707, 64
    %v713 = vpop.permute.xlu0 %712
    %v716 = vsel %vm710, %v713, %v650
    %v717 = vrot.slane %v327, 7
    %v719 = vrot.slane %v391, 6
    %v721 = vrot.slane %v455, 5
    %v723 = vrot.slane %v519, 4
    %v725 = vrot.slane %v583, 3
    %v727 = vrot.slane %v647, 2
    %v730 = vrot.slane %v716, 1
    %731 = vrot.lane.b32.xlu0 %v730, 64
    %v732 = vpop.permute.xlu0 %731
    %vm734 = vcmask 1040384
    %v735 = vsel %vm734, %v263, %v717
    %vm736 = vcmask 1041408
    %v737 = vsel %vm736, %v735, %v719
    %vm738 = vcmask 1042432
    %v739 = vsel %vm738, %v737, %v721
    %vm740 = vcmask 1043456
    %v741 = vsel %vm740, %v739, %v723
    %vm742 = vcmask 1044480
    %v743 = vsel %vm742, %v741, %v725
    %vm744 = vcmask 1045504
    %v745 = vsel %vm744, %v743, %v727
    %vm746 = vcmask 1046528
    %v747 = vsel %vm746, %v745, %v732
    %v748 = vld [vmem:[%s4] sm:$0xff]
    %v749 = vld [vmem:[%s4 + $0x8] sm:$0xff]
    %v750 = vld [vmem:[%s4 + $0x10] sm:$0xff]
    %v751 = vld [vmem:[%s4 + $0x18] sm:$0xff]
    %v752 = vld [vmem:[%s4 + $0x20] sm:$0xff]
    %v753 = vld [vmem:[%s4 + $0x28] sm:$0xff]
    %v754 = vld [vmem:[%s4 + $0x30] sm:$0xff]
    %v755 = vld [vmem:[%s4 + $0x38] sm:$0xff]
    %v756 = vld [vmem:[%s5] sm:$0x1]
    %v758 = vperm.slane %v756, 0
    %761 = vrot.lane.b32.xlu0 %v747, 64
    %v762 = vpop.permute.xlu0 %761
    %v763 = vsel %vm124, %v762, 0
    %765 = vmatpush.msra.mxu0 0.0
    %766 = vmatpush.msra.mxu0 0.0
    %767 = vmatpush.msra.mxu0 0.0
    %768 = vmatpush.msra.mxu0 0.0
    %769 = vmatpush.msra.mxu0 0.0
    %770 = vmatpush.msra.mxu0 0.0
    %771 = vmatpush.msra.mxu0 0.0
    %772 = vmatpush.msra.mxu0 0.0
    %773 = vmatpush.msra.mxu0 %v755
    %774 = vmatpush.msra.mxu0 %v754
    %775 = vmatpush.msra.mxu0 %v753
    %776 = vmatpush.msra.mxu0 %v752
    %777 = vmatpush.msra.mxu0 %v751
    %778 = vmatpush.msra.mxu0 %v750
    %779 = vmatpush.msra.mxu0 %v749
    %780 = vmatpush.msra.mxu0 %v748
    %781 = vmatmul.f32.gmra.mxu0 %v763
    %v782 = vpop.f32.mrf.mxu0
    %v783 = vadd.f32 %v758, %v782
    %784 = vdwg.mxu0
    %vm785 = vcmask 64512
    %786 = vst.msk [vmem:[#allocation5] sm:$0xff] %vm785, %v783
    // Predicated region
    $region30: #{tpu_custom_call.1} parent=1 // pred_check
      _
    $region31: #{tpu_custom_call.1} parent=1 // pred_check_branch
      %788 = sbr.rel (0) target = $region33
    $region32: #{tpu_custom_call.1} parent=1 // pred_region
      %790 = vsyncadd [#allocation4], 0
      %s792 = sshll.u32 [#allocation5], 4
      %s793 = int_to_ptr.vmem [resolvable:$true] %s792
      %s794 = sshll.u32 %s6, 4
      %s795 = int_to_ptr.hbm [resolvable:$true] %s794
      %797 = dma.vmem_to_hbm [thread:$0]  %s793, 128, %s795, [#allocation4]
    $region33: #{tpu_custom_call.1} parent=1 // pred_fallthru
      _
    // Predicated region
    $region34: #{tpu_custom_call.1} parent=1 // pred_check
      _
    $region35: #{tpu_custom_call.1} parent=1 // pred_check_branch
      %799 = sbr.rel (0) target = $region37
    $region36: #{tpu_custom_call.1} parent=1 // pred_region
      %801 = dma.done [#allocation4], 128
    $region37: #{tpu_custom_call.1} parent=1 // pred_fallthru
      _
    %802 = vsyncpa [#allocation3], 1
    %803 = vsyncpa [#allocation4], 1

</llo_original>
